<compile_context>
chip_gen: v7x
topology: tpu7x:2x2x1
jax: 0.10.0
libtpu: 0.0.40
codegen_flags: <defaults>
</compile_context>

<pallas_src>
import math
from functools import partial

import jax
import jax.numpy as jnp
from jax.experimental import pallas as pl
from jax.experimental.pallas import tpu as pltpu

LOG_SIG_CAP_MAX = 2.0
LOG_SIG_CAP_MIN = -20.0
EPS = 1e-6


def gaussian_actor_kernel(
    x_ref, noise_ref, w1_ref, w2_ref, wh_ref, b_ref, out_ref,
    *, h1_dim, h2_dim, action_dim, max_action,
):
    x = x_ref[...]

    # Packed biases: [b1 | b2 | bm | bs] -> load once, static lane slices.
    b_all = b_ref[...]
    b1 = b_all[:, :h1_dim]
    b2 = b_all[:, h1_dim:h1_dim + h2_dim]
    bh = b_all[:, h1_dim + h2_dim:]

    # base_layers: Linear -> ReLU -> Linear -> ReLU (MXU matmuls, VPU relu).
    h1 = jnp.maximum(
        jnp.dot(x, w1_ref[...], preferred_element_type=jnp.float32) + b1, 0.0)
    h2 = jnp.maximum(
        jnp.dot(h1, w2_ref[...], preferred_element_type=jnp.float32) + b2, 0.0)

    # Fused heads: one matmul producing [mu | log_sigma].
    heads = jnp.dot(h2, wh_ref[...], preferred_element_type=jnp.float32) + bh
    mu = heads[:, :action_dim]
    log_sigma = jnp.clip(heads[:, action_dim:], LOG_SIG_CAP_MIN, LOG_SIG_CAP_MAX)
    sigma = jnp.exp(log_sigma)

    # Sample: raw = mu + sigma * eps, eps ~ N(0,1) supplied by wrapper.
    eps = noise_ref[...]
    raw = mu + sigma * eps
    a = jnp.tanh(raw)
    a_sq = a * a

    # Combined diag-Gaussian log-prob + tanh change-of-variables correction:
    #   log_pi = sum_j ( -0.5*eps_j^2 - log_sigma_j - log(1 - a_j^2 + EPS) )
    #            - 0.5 * A * log(2*pi)
    # (z = (raw - mu)/sigma == eps; single cross-lane reduction.)
    per_elem = -0.5 * (eps * eps) - log_sigma - jnp.log(1.0 - a_sq + EPS)
    const = jnp.float32(-0.5 * action_dim * math.log(2.0 * math.pi))
    log_pi = jnp.sum(per_elem, axis=1, keepdims=True) + const

    # Single merged output slab: actions in lanes [0, A), log_pi in lane A.
    out_ref[:, :action_dim] = a * jnp.float32(max_action)
    out_ref[:, action_dim:] = log_pi


def gaussian_actor_forward(states, params, noise, max_action):
    """states: [B, S] f32, noise: [B, A] f32 ~ N(0,1).

    Returns (actions [B, A], log_pis [B])."""
    B, S = states.shape
    H1 = params["w1"].shape[1]
    H2 = params["w2"].shape[1]
    A = params["wm"].shape[1]

    # One-time layout plumbing in the wrapper.
    wh = jnp.concatenate([params["wm"], params["ws"]], axis=1)              # [H2, 2A]
    b_all = jnp.concatenate(
        [params["b1"], params["b2"], params["bm"], params["bs"]], axis=1)   # [1, H1+H2+2A]

    # Batch tile: multiple of 8 (sublane), capped at 256 to stay well inside
    # every chip's VMEM even with double-buffered state/noise/output tiles.
    TB = min(256, ((B + 7) // 8) * 8)
    B_pad = ((B + TB - 1) // TB) * TB
    if B_pad != B:
        pad = B_pad - B
        states = jnp.pad(states, ((0, pad), (0, 0)))
        noise = jnp.pad(noise, ((0, pad), (0, 0)))

    kernel = partial(
        gaussian_actor_kernel,
        h1_dim=H1, h2_dim=H2, action_dim=A, max_action=float(max_action),
    )

    out = pl.pallas_call(
        kernel,
        out_shape=jax.ShapeDtypeStruct((B_pad, A + 1), jnp.float32),
        grid_spec=pltpu.PrefetchScalarGridSpec(
            num_scalar_prefetch=0,
            grid=(B_pad // TB,),
            in_specs=[
                # Batch-tiled inputs (pipelined over the grid).
                pl.BlockSpec((TB, S), lambda i: (i, 0)),
                pl.BlockSpec((TB, A), lambda i: (i, 0)),
                # Weights / packed biases: constant index_map -> DMA'd once,
                # VMEM-resident across all grid iterations.
                pl.BlockSpec((S, H1), lambda i: (0, 0)),
                pl.BlockSpec((H1, H2), lambda i: (0, 0)),
                pl.BlockSpec((H2, 2 * A), lambda i: (0, 0)),
                pl.BlockSpec((1, H1 + H2 + 2 * A), lambda i: (0, 0)),
            ],
            out_specs=pl.BlockSpec((TB, A + 1), lambda i: (i, 0)),
        ),
        compiler_params=pltpu.CompilerParams(
            dimension_semantics=("parallel",)),
    )(states, noise, params["w1"], params["w2"], wh, b_all)

    actions = out[:B, :A]
    log_pis = out[:B, A]
    return actions, log_pis


def reference_forward(states, params, noise, max_action):
    """Pure-JAX reference mirroring the PyTorch module (with injected noise)."""
    h1 = jax.nn.relu(states @ params["w1"] + params["b1"])
    h2 = jax.nn.relu(h1 @ params["w2"] + params["b2"])
    mu = h2 @ params["wm"] + params["bm"]
    log_sigma = jnp.clip(h2 @ params["ws"] + params["bs"],
                         LOG_SIG_CAP_MIN, LOG_SIG_CAP_MAX)
    sigma = jnp.exp(log_sigma)
    raw = mu + sigma * noise
    z = (raw - mu) / sigma
    log_pis = jnp.sum(-0.5 * z * z - log_sigma - 0.5 * math.log(2.0 * math.pi),
                      axis=1)
    a = jnp.tanh(raw)
    diff = jnp.sum(jnp.log(1.0 - a * a + EPS), axis=1)
    return a * max_action, log_pis - diff


def init_params(key, state_dim, action_dim, layer_units):
    """PyTorch nn.Linear-style init: U(-1/sqrt(fan_in), 1/sqrt(fan_in))."""
    dims = [state_dim, *layer_units]
    params = {}
    keys = jax.random.split(key, 8)

    def lin(kw, kb, fan_in, fan_out):
        bound = 1.0 / math.sqrt(fan_in)
        w = jax.random.uniform(kw, (fan_in, fan_out), jnp.float32, -bound, bound)
        b = jax.random.uniform(kb, (1, fan_out), jnp.float32, -bound, bound)
        return w, b

    params["w1"], params["b1"] = lin(keys[0], keys[1], dims[0], dims[1])
    params["w2"], params["b2"] = lin(keys[2], keys[3], dims[1], dims[2])
    params["wm"], params["bm"] = lin(keys[4], keys[5], dims[2], action_dim)
    params["ws"], params["bs"] = lin(keys[6], keys[7], dims[2], action_dim)
    return params


if __name__ == "__main__":
    # Small shapes consistent with the module's constructor.
    batch = 8
    state_dim = 8
    action_dim = 4
    layer_units = (32, 32)
    max_action = 1.0

    key = jax.random.PRNGKey(0)
    k_params, k_states, k_noise = jax.random.split(key, 3)

    params = init_params(k_params, state_dim, action_dim, layer_units)
    states = jax.random.normal(k_states, (batch, state_dim), jnp.float32)
    # TODO(synk): dist.sample() RNG lives in the wrapper (jax.random), not in-kernel.
    noise = jax.random.normal(k_noise, (batch, action_dim), jnp.float32)

    actions, log_pis = gaussian_actor_forward(states, params, noise, max_action)
    jax.block_until_ready((actions, log_pis))

    # Shape / sanity checks.
    assert actions.shape == (batch, action_dim)
    assert log_pis.shape == (batch,)
    assert bool(jnp.all(jnp.isfinite(actions))) and bool(jnp.all(jnp.isfinite(log_pis)))
    assert bool(jnp.all(jnp.abs(actions) <= max_action))

    # Numerical check against the pure-JAX reference of the PyTorch module.
    ref_actions, ref_log_pis = reference_forward(states, params, noise, max_action)
    assert bool(jnp.allclose(actions, ref_actions, rtol=1e-3, atol=1e-3))
    assert bool(jnp.allclose(log_pis, ref_log_pis, rtol=1e-3, atol=1e-3))

    print("KERNEL_OK")
</pallas_src>

<mosaic_0001>
module attributes {stable_mosaic.version = 11 : i64} {
  func.func @gaussian_actor_kernel(%arg0: i32, %arg1: memref<8x8xf32, #tpu.memory_space<vmem>>, %arg2: memref<8x4xf32, #tpu.memory_space<vmem>>, %arg3: memref<8x32xf32, #tpu.memory_space<vmem>>, %arg4: memref<32x32xf32, #tpu.memory_space<vmem>>, %arg5: memref<32x8xf32, #tpu.memory_space<vmem>>, %arg6: memref<1x72xf32, #tpu.memory_space<vmem>>, %arg7: memref<8x5xf32, #tpu.memory_space<vmem>>) attributes {dimension_semantics = [#tpu.dimension_semantics<parallel>], iteration_bounds = array<i64: 1>, scalar_prefetch = 0 : i64, scratch_operands = 0 : i64, tpu.core_type = #tpu.core_type<tc>, window_params = [{transform_indices = @transform_0, window_bounds = array<i64: 8, 8>}, {transform_indices = @transform_1, window_bounds = array<i64: 8, 4>}, {pipeline_mode = #tpu.pipeline_mode<synchronous>, transform_indices = @transform_2, window_bounds = array<i64: 8, 32>}, {pipeline_mode = #tpu.pipeline_mode<synchronous>, transform_indices = @transform_3, window_bounds = array<i64: 32, 32>}, {pipeline_mode = #tpu.pipeline_mode<synchronous>, transform_indices = @transform_4, window_bounds = array<i64: 32, 8>}, {pipeline_mode = #tpu.pipeline_mode<synchronous>, transform_indices = @transform_5, window_bounds = array<i64: 1, 72>}, {transform_indices = @transform_6, window_bounds = array<i64: 8, 5>}]} {
    %c0 = arith.constant 0 : index
    %c0_0 = arith.constant 0 : index
    %0 = vector.load %arg1[%c0, %c0_0] : memref<8x8xf32, #tpu.memory_space<vmem>>, vector<8x8xf32>
    %c0_1 = arith.constant 0 : index
    %c0_2 = arith.constant 0 : index
    %1 = vector.load %arg6[%c0_1, %c0_2] : memref<1x72xf32, #tpu.memory_space<vmem>>, vector<1x72xf32>
    %2 = vector.extract_strided_slice %1 {offsets = [0, 0], sizes = [1, 32], strides = [1, 1]} : vector<1x72xf32> to vector<1x32xf32>
    %3 = vector.extract_strided_slice %1 {offsets = [0, 32], sizes = [1, 32], strides = [1, 1]} : vector<1x72xf32> to vector<1x32xf32>
    %4 = vector.extract_strided_slice %1 {offsets = [0, 64], sizes = [1, 8], strides = [1, 1]} : vector<1x72xf32> to vector<1x8xf32>
    %c0_3 = arith.constant 0 : index
    %c0_4 = arith.constant 0 : index
    %5 = vector.load %arg3[%c0_3, %c0_4] : memref<8x32xf32, #tpu.memory_space<vmem>>, vector<8x32xf32>
    %cst = arith.constant dense<0.000000e+00> : vector<8x32xf32>
    %6 = tpu.matmul %0, %5, %cst {dimension_numbers = #tpu.dot_dimension_numbers<[1], [0], [0], [1], [0, 0, 1, 1], [], []>} : vector<8x8xf32>, vector<8x32xf32>, vector<8x32xf32> -> vector<8x32xf32>
    %7 = vector.broadcast %2 : vector<1x32xf32> to vector<8x32xf32>
    %8 = arith.addf %6, %7 : vector<8x32xf32>
    %cst_5 = arith.constant 0.000000e+00 : f32
    %9 = vector.broadcast %cst_5 : f32 to vector<8x32xf32>
    %10 = arith.maximumf %8, %9 : vector<8x32xf32>
    %c0_6 = arith.constant 0 : index
    %c0_7 = arith.constant 0 : index
    %11 = vector.load %arg4[%c0_6, %c0_7] : memref<32x32xf32, #tpu.memory_space<vmem>>, vector<32x32xf32>
    %cst_8 = arith.constant dense<0.000000e+00> : vector<8x32xf32>
    %12 = tpu.matmul %10, %11, %cst_8 {dimension_numbers = #tpu.dot_dimension_numbers<[1], [0], [0], [1], [0, 0, 1, 1], [], []>} : vector<8x32xf32>, vector<32x32xf32>, vector<8x32xf32> -> vector<8x32xf32>
    %13 = vector.broadcast %3 : vector<1x32xf32> to vector<8x32xf32>
    %14 = arith.addf %12, %13 : vector<8x32xf32>
    %cst_9 = arith.constant 0.000000e+00 : f32
    %15 = vector.broadcast %cst_9 : f32 to vector<8x32xf32>
    %16 = arith.maximumf %14, %15 : vector<8x32xf32>
    %c0_10 = arith.constant 0 : index
    %c0_11 = arith.constant 0 : index
    %17 = vector.load %arg5[%c0_10, %c0_11] : memref<32x8xf32, #tpu.memory_space<vmem>>, vector<32x8xf32>
    %cst_12 = arith.constant dense<0.000000e+00> : vector<8x8xf32>
    %18 = tpu.matmul %16, %17, %cst_12 {dimension_numbers = #tpu.dot_dimension_numbers<[1], [0], [0], [1], [0, 0, 1, 1], [], []>} : vector<8x32xf32>, vector<32x8xf32>, vector<8x8xf32> -> vector<8x8xf32>
    %19 = vector.broadcast %4 : vector<1x8xf32> to vector<8x8xf32>
    %20 = arith.addf %18, %19 : vector<8x8xf32>
    %21 = vector.extract_strided_slice %20 {offsets = [0, 0], sizes = [8, 4], strides = [1, 1]} : vector<8x8xf32> to vector<8x4xf32>
    %22 = vector.extract_strided_slice %20 {offsets = [0, 4], sizes = [8, 4], strides = [1, 1]} : vector<8x8xf32> to vector<8x4xf32>
    %cst_13 = arith.constant -2.000000e+01 : f32
    %cst_14 = arith.constant 2.000000e+00 : f32
    %23 = vector.broadcast %cst_13 : f32 to vector<8x4xf32>
    %24 = arith.maximumf %23, %22 : vector<8x4xf32>
    %25 = vector.broadcast %cst_14 : f32 to vector<8x4xf32>
    %26 = arith.minimumf %25, %24 : vector<8x4xf32>
    %27 = math.exp %26 : vector<8x4xf32>
    %c0_15 = arith.constant 0 : index
    %c0_16 = arith.constant 0 : index
    %28 = vector.load %arg2[%c0_15, %c0_16] : memref<8x4xf32, #tpu.memory_space<vmem>>, vector<8x4xf32>
    %29 = arith.mulf %27, %28 : vector<8x4xf32>
    %30 = arith.addf %21, %29 : vector<8x4xf32>
    %31 = math.tanh %30 : vector<8x4xf32>
    %32 = arith.mulf %31, %31 : vector<8x4xf32>
    %33 = arith.mulf %28, %28 : vector<8x4xf32>
    %cst_17 = arith.constant -5.000000e-01 : f32
    %34 = vector.broadcast %cst_17 : f32 to vector<8x4xf32>
    %35 = arith.mulf %34, %33 : vector<8x4xf32>
    %36 = arith.subf %35, %26 : vector<8x4xf32>
    %cst_18 = arith.constant 1.000000e+00 : f32
    %37 = vector.broadcast %cst_18 : f32 to vector<8x4xf32>
    %38 = arith.subf %37, %32 : vector<8x4xf32>
    %cst_19 = arith.constant 9.99999997E-7 : f32
    %39 = vector.broadcast %cst_19 : f32 to vector<8x4xf32>
    %40 = arith.addf %38, %39 : vector<8x4xf32>
    %41 = math.log %40 : vector<8x4xf32>
    %42 = arith.subf %36, %41 : vector<8x4xf32>
    %cst_20 = arith.constant dense<0.000000e+00> : vector<8xf32>
    %43 = vector.multi_reduction <add>, %42, %cst_20 [1] : vector<8x4xf32> to vector<8xf32>
    %44 = vector.shape_cast %43 : vector<8xf32> to vector<8x1xf32>
    %cst_21 = arith.constant -3.67575407 : f32
    %45 = vector.broadcast %cst_21 : f32 to vector<8x1xf32>
    %46 = arith.addf %44, %45 : vector<8x1xf32>
    %cst_22 = arith.constant 1.000000e+00 : f32
    %47 = vector.broadcast %cst_22 : f32 to vector<8x4xf32>
    %48 = arith.mulf %31, %47 : vector<8x4xf32>
    %c0_23 = arith.constant 0 : index
    %c0_24 = arith.constant 0 : index
    %49 = vector.load %arg7[%c0_23, %c0_24] : memref<8x5xf32, #tpu.memory_space<vmem>>, vector<8x4xf32>
    tpu.vector_store %arg7[%c0_23, %c0_24], %48 {strides = array<i32>} : memref<8x5xf32, #tpu.memory_space<vmem>>, vector<8x4xf32>,
    %c0_25 = arith.constant 0 : index
    %c4 = arith.constant 4 : index
    %50 = vector.load %arg7[%c0_25, %c4] : memref<8x5xf32, #tpu.memory_space<vmem>>, vector<8x1xf32>
    tpu.vector_store %arg7[%c0_25, %c4], %46 {strides = array<i32>} : memref<8x5xf32, #tpu.memory_space<vmem>>, vector<8x1xf32>,
    return
  }
  func.func @transform_0(%arg0: i32) -> (i32, i32) {
    %c0_i32 = arith.constant 0 : i32
    %c0_i32_0 = arith.constant 0 : i32
    return %arg0, %c0_i32 : i32, i32
  }
  func.func @transform_1(%arg0: i32) -> (i32, i32) {
    %c0_i32 = arith.constant 0 : i32
    %c0_i32_0 = arith.constant 0 : i32
    return %arg0, %c0_i32 : i32, i32
  }
  func.func @transform_2(%arg0: i32) -> (i32, i32) {
    %c0_i32 = arith.constant 0 : i32
    %c0_i32_0 = arith.constant 0 : i32
    %c0_i32_1 = arith.constant 0 : i32
    return %c0_i32, %c0_i32_0 : i32, i32
  }
  func.func @transform_3(%arg0: i32) -> (i32, i32) {
    %c0_i32 = arith.constant 0 : i32
    %c0_i32_0 = arith.constant 0 : i32
    %c0_i32_1 = arith.constant 0 : i32
    return %c0_i32, %c0_i32_0 : i32, i32
  }
  func.func @transform_4(%arg0: i32) -> (i32, i32) {
    %c0_i32 = arith.constant 0 : i32
    %c0_i32_0 = arith.constant 0 : i32
    %c0_i32_1 = arith.constant 0 : i32
    return %c0_i32, %c0_i32_0 : i32, i32
  }
  func.func @transform_5(%arg0: i32) -> (i32, i32) {
    %c0_i32 = arith.constant 0 : i32
    %c0_i32_0 = arith.constant 0 : i32
    %c0_i32_1 = arith.constant 0 : i32
    return %c0_i32, %c0_i32_0 : i32, i32
  }
  func.func @transform_6(%arg0: i32) -> (i32, i32) {
    %c0_i32 = arith.constant 0 : i32
    %c0_i32_0 = arith.constant 0 : i32
    return %arg0, %c0_i32 : i32, i32
  }
}

</mosaic_0001>

<llo_original>
// kernel: tpu_custom_call.1
$region0: #{tpu_custom_call.1}
  #allocation0 [shape = 'u32[]', space=smem, size = 0x4, offset = 0x4, fixed_abs, tag = 'smem constant byte address 0x4 - core index']
  #allocation1 [shape = 'u32[144,128]{1,0:T(1,128)}', space=vmem, size = 0x12000, scoped, tag = 'internal scratch']
  %s0 = inlined_call_operand.vmem [shape: f32[8,8], index: 0, kind: input, shape index: {}]
  %s1 = inlined_call_operand.vmem [shape: f32[8,4], index: 1, kind: input, shape index: {}]
  %s2 = inlined_call_operand.vmem [shape: f32[8,32], index: 2, kind: input, shape index: {}]
  %s3 = inlined_call_operand.vmem [shape: f32[32,32], index: 3, kind: input, shape index: {}]
  %s4 = inlined_call_operand.vmem [shape: f32[32,8], index: 4, kind: input, shape index: {}]
  %s5 = inlined_call_operand.vmem [shape: f32[1,72], index: 5, kind: input, shape index: {}]
  %s6 = inlined_call_operand.hbm [shape: f32[8,5], index: 6, kind: output, shape index: {}]
  %s7 = sld [smem:[#allocation0]]
  $region34: #{tpu_custom_call.1} parent=0
    _
  %s9 = ssub.s32 1, %s7
  %s10 = scalar_select 0, %s9, %s7
  $region1: #{tpu_custom_call.1} parent=0
    #allocation2 [shape = 'u8[4096]{0}', space=vmem, size = 0x1000, scoped, tag = 'output window, operand 0, single buffered']
    #allocation3 [shape = 's32[1]{0}', space=sflag, size = 0x4, scoped, tag = 'scoped memory for tpu_custom_call.1']
    %11 = vsyncpa [#allocation3], 0
    // Predicated region
    $region2: #{tpu_custom_call.1} parent=1 // pred_check
      _
    $region3: #{tpu_custom_call.1} parent=1 // pred_check_branch
      %13 = sbr.rel (0) target = $region5
    $region4: #{tpu_custom_call.1} parent=1 // pred_region
      _
    $region5: #{tpu_custom_call.1} parent=1 // pred_fallthru
      _
    // Predicated region
    $region6: #{tpu_custom_call.1} parent=1 // pred_check
      _
    $region7: #{tpu_custom_call.1} parent=1 // pred_check_branch
      %15 = sbr.rel (0) target = $region9
    $region8: #{tpu_custom_call.1} parent=1 // pred_region
      _
    $region9: #{tpu_custom_call.1} parent=1 // pred_fallthru
      _
    // Predicated region
    $region10: #{tpu_custom_call.1} parent=1 // pred_check
      _
    $region11: #{tpu_custom_call.1} parent=1 // pred_check_branch
      %17 = sbr.rel (0) target = $region13
    $region12: #{tpu_custom_call.1} parent=1 // pred_region
      _
    $region13: #{tpu_custom_call.1} parent=1 // pred_fallthru
      _
    // Predicated region
    $region14: #{tpu_custom_call.1} parent=1 // pred_check
      _
    $region15: #{tpu_custom_call.1} parent=1 // pred_check_branch
      %19 = sbr.rel (0) target = $region17
    $region16: #{tpu_custom_call.1} parent=1 // pred_region
      _
    $region17: #{tpu_custom_call.1} parent=1 // pred_fallthru
      _
    // Predicated region
    $region18: #{tpu_custom_call.1} parent=1 // pred_check
      _
    $region19: #{tpu_custom_call.1} parent=1 // pred_check_branch
      %21 = sbr.rel (0) target = $region21
    $region20: #{tpu_custom_call.1} parent=1 // pred_region
      _
    $region21: #{tpu_custom_call.1} parent=1 // pred_fallthru
      _
    // Predicated region
    $region22: #{tpu_custom_call.1} parent=1 // pred_check
      _
    $region23: #{tpu_custom_call.1} parent=1 // pred_check_branch
      %23 = sbr.rel (0) target = $region25
    $region24: #{tpu_custom_call.1} parent=1 // pred_region
      _
    $region25: #{tpu_custom_call.1} parent=1 // pred_fallthru
      _
    %v24 = vld [vmem:[%s0] sm:$0xff]
    %v25 = vld [vmem:[%s5] sm:$0x1]
    %v26 = vld [vmem:[%s2] sm:$0xff]
    %v28 = vlaneseq
    %v29 = vshrl.u32 %v28, 7
    %v30 = vsub.s32 0, %v29
    %v31 = vrot.slane %v25, %v30
    %vm33 = vcmask 64512
    %v35 = vsel %vm33, %v24, 0
    %37 = vmatprep.subr.mxu0 0.0
    %38 = vmatpush1.msra.mxu0 %v26
    %39 = vmatprep.subr.mxu0 0.0
    %40 = vmatpush1.msra.mxu0 0.0
    %41 = vmatprep.subr.mxu0 0.0
    %42 = vmatpush1.msra.mxu0 0.0
    %43 = vmatprep.subr.mxu0 0.0
    %44 = vmatpush1.msra.mxu0 0.0
    %45 = vmatprep.subr.mxu0 0.0
    %46 = vmatpush1.msra.mxu0 0.0
    %47 = vmatprep.subr.mxu0 0.0
    %48 = vmatpush1.msra.mxu0 0.0
    %49 = vmatprep.subr.mxu0 0.0
    %50 = vmatpush1.msra.mxu0 0.0
    %51 = vmatprep.subr.mxu0 0.0
    %52 = vmatpush1.msra.mxu0 0.0
    %53 = vmatprep.subr.mxu0 0.0
    %54 = vmatpush1.msra.mxu0 0.0
    %55 = vmatprep.subr.mxu0 0.0
    %56 = vmatpush1.msra.mxu0 0.0
    %57 = vmatprep.subr.mxu0 0.0
    %58 = vmatpush1.msra.mxu0 0.0
    %59 = vmatprep.subr.mxu0 0.0
    %60 = vmatpush1.msra.mxu0 0.0
    %61 = vmatprep.subr.mxu0 0.0
    %62 = vmatpush1.msra.mxu0 0.0
    %63 = vmatprep.subr.mxu0 0.0
    %64 = vmatpush1.msra.mxu0 0.0
    %65 = vmatprep.subr.mxu0 0.0
    %66 = vmatpush1.msra.mxu0 0.0
    %67 = vmatprep.subr.mxu0 0.0
    %68 = vmatpush1.msra.mxu0 0.0
    %69 = vmatprep.subr.mxu0 0.0
    %70 = vmatpush1.msra.mxu0 0.0
    %71 = vmatprep.subr.mxu0 0.0
    %72 = vmatpush1.msra.mxu0 0.0
    %73 = vmatprep.subr.mxu0 0.0
    %74 = vmatpush1.msra.mxu0 0.0
    %75 = vmatprep.subr.mxu0 0.0
    %76 = vmatpush1.msra.mxu0 0.0
    %77 = vmatprep.subr.mxu0 0.0
    %78 = vmatpush1.msra.mxu0 0.0
    %79 = vmatprep.subr.mxu0 0.0
    %80 = vmatpush1.msra.mxu0 0.0
    %81 = vmatprep.subr.mxu0 0.0
    %82 = vmatpush1.msra.mxu0 0.0
    %83 = vmatprep.subr.mxu0 0.0
    %84 = vmatpush1.msra.mxu0 0.0
    %85 = vmatprep.subr.mxu0 0.0
    %86 = vmatpush1.msra.mxu0 0.0
    %87 = vmatprep.subr.mxu0 0.0
    %88 = vmatpush1.msra.mxu0 0.0
    %89 = vmatprep.subr.mxu0 0.0
    %90 = vmatpush1.msra.mxu0 0.0
    %91 = vmatprep.subr.mxu0 0.0
    %92 = vmatpush1.msra.mxu0 0.0
    %93 = vmatprep.subr.mxu0 0.0
    %94 = vmatpush1.msra.mxu0 0.0
    %95 = vmatprep.subr.mxu0 0.0
    %96 = vmatpush1.msra.mxu0 0.0
    %97 = vmatprep.subr.mxu0 0.0
    %98 = vmatpush1.msra.mxu0 0.0
    %99 = vmatprep.subr.mxu0 0.0
    %100 = vmatpush1.msra.mxu0 0.0
    %101 = vmatprep.mubr.f32.mxu0 0.0
    %102 = vmatmul.mubr.f32.gmra.mrb[0].mxu0 %v35
    %v103 = vpop.f32.mrb[0].mxu0
    %v104 = vadd.f32 %v31, %v103
    %v105 = vpop.f32.mrb[0].mxu0
    %106 = vdwg.mxu0
    %v107 = vmax.f32 %v104, 0.0
    %v108 = vld [vmem:[%s3] sm:$0xff]
    %v109 = vld [vmem:[%s3 + $0x8] sm:$0xff]
    %v110 = vld [vmem:[%s3 + $0x10] sm:$0xff]
    %v111 = vld [vmem:[%s3 + $0x18] sm:$0xff]
    %112 = vrot.lane.b32.xlu0 %v31, 96
    %v113 = vpop.permute.xlu0 %112
    %vm115 = vcmask 261120
    %v117 = vsel %vm115, %v107, 0
    %119 = vmatprep.subr.mxu0 0.0
    %120 = vmatpush1.msra.mxu0 %v108
    %121 = vmatprep.subr.mxu0 0.0
    %122 = vmatpush1.msra.mxu0 %v109
    %123 = vmatprep.subr.mxu0 0.0
    %124 = vmatpush1.msra.mxu0 %v110
    %125 = vmatprep.subr.mxu0 0.0
    %126 = vmatpush1.msra.mxu0 %v111
    %127 = vmatprep.subr.mxu0 0.0
    %128 = vmatpush1.msra.mxu0 0.0
    %129 = vmatprep.subr.mxu0 0.0
    %130 = vmatpush1.msra.mxu0 0.0
    %131 = vmatprep.subr.mxu0 0.0
    %132 = vmatpush1.msra.mxu0 0.0
    %133 = vmatprep.subr.mxu0 0.0
    %134 = vmatpush1.msra.mxu0 0.0
    %135 = vmatprep.subr.mxu0 0.0
    %136 = vmatpush1.msra.mxu0 0.0
    %137 = vmatprep.subr.mxu0 0.0
    %138 = vmatpush1.msra.mxu0 0.0
    %139 = vmatprep.subr.mxu0 0.0
    %140 = vmatpush1.msra.mxu0 0.0
    %141 = vmatprep.subr.mxu0 0.0
    %142 = vmatpush1.msra.mxu0 0.0
    %143 = vmatprep.subr.mxu0 0.0
    %144 = vmatpush1.msra.mxu0 0.0
    %145 = vmatprep.subr.mxu0 0.0
    %146 = vmatpush1.msra.mxu0 0.0
    %147 = vmatprep.subr.mxu0 0.0
    %148 = vmatpush1.msra.mxu0 0.0
    %149 = vmatprep.subr.mxu0 0.0
    %150 = vmatpush1.msra.mxu0 0.0
    %151 = vmatprep.subr.mxu0 0.0
    %152 = vmatpush1.msra.mxu0 0.0
    %153 = vmatprep.subr.mxu0 0.0
    %154 = vmatpush1.msra.mxu0 0.0
    %155 = vmatprep.subr.mxu0 0.0
    %156 = vmatpush1.msra.mxu0 0.0
    %157 = vmatprep.subr.mxu0 0.0
    %158 = vmatpush1.msra.mxu0 0.0
    %159 = vmatprep.subr.mxu0 0.0
    %160 = vmatpush1.msra.mxu0 0.0
    %161 = vmatprep.subr.mxu0 0.0
    %162 = vmatpush1.msra.mxu0 0.0
    %163 = vmatprep.subr.mxu0 0.0
    %164 = vmatpush1.msra.mxu0 0.0
    %165 = vmatprep.subr.mxu0 0.0
    %166 = vmatpush1.msra.mxu0 0.0
    %167 = vmatprep.subr.mxu0 0.0
    %168 = vmatpush1.msra.mxu0 0.0
    %169 = vmatprep.subr.mxu0 0.0
    %170 = vmatpush1.msra.mxu0 0.0
    %171 = vmatprep.subr.mxu0 0.0
    %172 = vmatpush1.msra.mxu0 0.0
    %173 = vmatprep.subr.mxu0 0.0
    %174 = vmatpush1.msra.mxu0 0.0
    %175 = vmatprep.subr.mxu0 0.0
    %176 = vmatpush1.msra.mxu0 0.0
    %177 = vmatprep.subr.mxu0 0.0
    %178 = vmatpush1.msra.mxu0 0.0
    %179 = vmatprep.subr.mxu0 0.0
    %180 = vmatpush1.msra.mxu0 0.0
    %181 = vmatprep.subr.mxu0 0.0
    %182 = vmatpush1.msra.mxu0 0.0
    %183 = vmatprep.mubr.f32.mxu0 0.0
    %184 = vmatmul.mubr.f32.gmra.mrb[0].mxu0 %v117
    %v185 = vpop.f32.mrb[0].mxu0
    %v186 = vadd.f32 %v113, %v185
    %v187 = vpop.f32.mrb[0].mxu0
    %188 = vdwg.mxu0
    %v189 = vmax.f32 %v186, 0.0
    %v190 = vld [vmem:[%s4] sm:$0xff]
    %v191 = vld [vmem:[%s4 + $0x8] sm:$0xff]
    %v192 = vld [vmem:[%s4 + $0x10] sm:$0xff]
    %v193 = vld [vmem:[%s4 + $0x18] sm:$0xff]
    %194 = vrot.lane.b32.xlu0 %v31, 64
    %v195 = vpop.permute.xlu0 %194
    %v198 = vsel %vm115, %v189, 0
    %200 = vmatprep.subr.mxu0 0.0
    %201 = vmatpush1.msra.mxu0 %v190
    %202 = vmatprep.subr.mxu0 0.0
    %203 = vmatpush1.msra.mxu0 %v191
    %204 = vmatprep.subr.mxu0 0.0
    %205 = vmatpush1.msra.mxu0 %v192
    %206 = vmatprep.subr.mxu0 0.0
    %207 = vmatpush1.msra.mxu0 %v193
    %208 = vmatprep.subr.mxu0 0.0
    %209 = vmatpush1.msra.mxu0 0.0
    %210 = vmatprep.subr.mxu0 0.0
    %211 = vmatpush1.msra.mxu0 0.0
    %212 = vmatprep.subr.mxu0 0.0
    %213 = vmatpush1.msra.mxu0 0.0
    %214 = vmatprep.subr.mxu0 0.0
    %215 = vmatpush1.msra.mxu0 0.0
    %216 = vmatprep.subr.mxu0 0.0
    %217 = vmatpush1.msra.mxu0 0.0
    %218 = vmatprep.subr.mxu0 0.0
    %219 = vmatpush1.msra.mxu0 0.0
    %220 = vmatprep.subr.mxu0 0.0
    %221 = vmatpush1.msra.mxu0 0.0
    %222 = vmatprep.subr.mxu0 0.0
    %223 = vmatpush1.msra.mxu0 0.0
    %224 = vmatprep.subr.mxu0 0.0
    %225 = vmatpush1.msra.mxu0 0.0
    %226 = vmatprep.subr.mxu0 0.0
    %227 = vmatpush1.msra.mxu0 0.0
    %228 = vmatprep.subr.mxu0 0.0
    %229 = vmatpush1.msra.mxu0 0.0
    %230 = vmatprep.subr.mxu0 0.0
    %231 = vmatpush1.msra.mxu0 0.0
    %232 = vmatprep.subr.mxu0 0.0
    %233 = vmatpush1.msra.mxu0 0.0
    %234 = vmatprep.subr.mxu0 0.0
    %235 = vmatpush1.msra.mxu0 0.0
    %236 = vmatprep.subr.mxu0 0.0
    %237 = vmatpush1.msra.mxu0 0.0
    %238 = vmatprep.subr.mxu0 0.0
    %239 = vmatpush1.msra.mxu0 0.0
    %240 = vmatprep.subr.mxu0 0.0
    %241 = vmatpush1.msra.mxu0 0.0
    %242 = vmatprep.subr.mxu0 0.0
    %243 = vmatpush1.msra.mxu0 0.0
    %244 = vmatprep.subr.mxu0 0.0
    %245 = vmatpush1.msra.mxu0 0.0
    %246 = vmatprep.subr.mxu0 0.0
    %247 = vmatpush1.msra.mxu0 0.0
    %248 = vmatprep.subr.mxu0 0.0
    %249 = vmatpush1.msra.mxu0 0.0
    %250 = vmatprep.subr.mxu0 0.0
    %251 = vmatpush1.msra.mxu0 0.0
    %252 = vmatprep.subr.mxu0 0.0
    %253 = vmatpush1.msra.mxu0 0.0
    %254 = vmatprep.subr.mxu0 0.0
    %255 = vmatpush1.msra.mxu0 0.0
    %256 = vmatprep.subr.mxu0 0.0
    %257 = vmatpush1.msra.mxu0 0.0
    %258 = vmatprep.subr.mxu0 0.0
    %259 = vmatpush1.msra.mxu0 0.0
    %260 = vmatprep.subr.mxu0 0.0
    %261 = vmatpush1.msra.mxu0 0.0
    %262 = vmatprep.subr.mxu0 0.0
    %263 = vmatpush1.msra.mxu0 0.0
    %264 = vmatprep.mubr.f32.mxu0 0.0
    %265 = vmatmul.mubr.f32.gmra.mrb[0].mxu0 %v198
    %v266 = vpop.f32.mrb[0].mxu0
    %v267 = vadd.f32 %v195, %v266
    %v268 = vpop.f32.mrb[0].mxu0
    %269 = vdwg.mxu0
    %v270 = vmax.f32 %v267, -20.0
    %v271 = vmin.f32 %v270, 2.0
    %v272 = vmul.f32 %v271, 1.442695
    %v273 = vpow.pop %v272
    %v274 = vld [vmem:[%s1] sm:$0xff]
    %276 = vrot.lane.b32.xlu0 %v274, 4
    %v277 = vpop.permute.xlu0 %276
    %v279 = vmul.f32 %v273, %v277
    %281 = vrot.lane.b32.xlu0 %v279, 124
    %v282 = vpop.permute.xlu0 %281
    %v284 = vadd.f32 %v267, %v282
    %v285 = vtanh.pop %v284
    %v286 = vmul.f32 %v285, %v285
    %v287 = vmul.f32 %v274, %v274
    %v288 = vmul.f32 %v287, -0.5
    %290 = vrot.lane.b32.xlu0 %v271, 124
    %v291 = vpop.permute.xlu0 %290
    %v293 = vsub.f32 %v288, %v291
    %v294 = vsub.f32 1.0, %v286
    %v295 = vadd.f32 %v294, 1e-06
    %v296 = vlog2.pop %v295
    %v297 = vmul.f32 %v296, 0.6931472
    %v298 = vsub.f32 %v293, %v297
    %vm299 = vcmask 31744
    %v300 = vsel %vm299, %v298, 0.0
    %301 = vadd.xlane.f32.xlu0 %v300
    %v302 = vpop.xlane.xlu0 %301
    %v303 = vadd.f32 %v302, -3.675754
    %304 = vst.msk [vmem:[#allocation2] sm:$0xff] %vm299, %v285
    %vm305 = vcmask 39968
    %306 = vst.msk [vmem:[#allocation2] sm:$0xff] %vm305, %v303
    // Predicated region
    $region26: #{tpu_custom_call.1} parent=1 // pred_check
      _
    $region27: #{tpu_custom_call.1} parent=1 // pred_check_branch
      %308 = sbr.rel (0) target = $region29
    $region28: #{tpu_custom_call.1} parent=1 // pred_region
      %s310 = ssub.s32 128, 128
      %311 = vsyncadd [#allocation3], %s310
      %s313 = sshll.u32 [#allocation2], 4
      %s314 = int_to_ptr.vmem [resolvable:$true] %s313
      %316 = dma.vmem_to_hbm [thread:$0]  %s314, 128, %s6, [#allocation3]
    $region29: #{tpu_custom_call.1} parent=1 // pred_fallthru
      _
    // Predicated region
    $region30: #{tpu_custom_call.1} parent=1 // pred_check
      _
    $region31: #{tpu_custom_call.1} parent=1 // pred_check_branch
      %318 = sbr.rel (0) target = $region33
    $region32: #{tpu_custom_call.1} parent=1 // pred_region
      %319 = dma.done [#allocation3], 128
    $region33: #{tpu_custom_call.1} parent=1 // pred_fallthru
      _
    %320 = vsyncpa [#allocation3], 1

</llo_original>
